<compile_context>
chip_gen: v6e
topology: v6e:2x2x1
jax: 0.10.0
libtpu: 0.0.40
codegen_flags: <defaults>
</compile_context>

<pallas_src>
import jax
import jax.numpy as jnp
from jax import lax
from jax.experimental import pallas as pl
from jax.experimental.pallas import tpu as pltpu


def _round_up(x, m):
    return ((x + m - 1) // m) * m


def _make_kernel(tn, rhs_resident):
    def kernel(zi_ref, zr_ref, out_ref):
        # zi_ref : (tm, D)  rows-block i of z
        # zr_ref : (n_rhs, D) full padded z if resident, else (tn, D) rows-block j
        # out_ref: (tm, tn) = sigmoid(zi @ zj.T)
        #
        # sigmoid(x) = 0.5 * (tanh(0.5*x) + 1): one EUP transcendental per element.
        # Fold the inner 0.5 into the small LHS tile (tm*D muls, not tm*tn).
        zi = zi_ref[...] * 0.5
        if rhs_resident:
            j = pl.program_id(1)
            start = pl.multiple_of(j * tn, 128)     # tn is a multiple of 128
            zj = zr_ref[pl.ds(start, tn), :]
        else:
            zj = zr_ref[...]
        # Contract D with D: z.T is folded into the MXU operand feed (no
        # materialized transpose / XLU relayout of the RHS tile).
        half_logits = lax.dot_general(
            zi, zj,
            dimension_numbers=(((1,), (1,)), ((), ())),
            preferred_element_type=jnp.float32,
        )
        out_ref[...] = (0.5 * jnp.tanh(half_logits) + 0.5).astype(out_ref.dtype)

    return kernel


def vgae_decoder(z, *, tile=1024, rhs_resident_max_bytes=4 * 1024 * 1024):
    """adj_pred = sigmoid(z @ z.T) computed with a Pallas TPU kernel.  z: (N, D)."""
    N, D = z.shape
    itemsize = jnp.dtype(z.dtype).itemsize

    # Square, lane-dense (multiple-of-128) output tile, as large as allowed.
    tm = tn = max(128, (min(tile, _round_up(N, 128)) // 128) * 128)
    gi = pl.cdiv(N, tm)
    gj = pl.cdiv(N, tn)

    # Pad z's rows (tiny: N*D elements) so all in-kernel reads are in bounds.
    # The output itself stays (N, N); Pallas masks the ragged edge writes.
    n_rhs = _round_up(N, tn)
    z_pad = jnp.pad(z, ((0, n_rhs - N), (0, 0))) if n_rhs != N else z

    # Keep the RHS operand fully VMEM-resident when small (fetched once).
    rhs_bytes = n_rhs * D * itemsize
    rhs_resident = rhs_bytes <= rhs_resident_max_bytes

    if rhs_resident:
        rhs_spec = pl.BlockSpec((n_rhs, D), lambda i, j: (0, 0))
        rhs_hbm_reads = rhs_bytes                        # fetched once
        rhs_vmem = 2 * rhs_bytes                         # double-buffer allocation
    else:
        rhs_spec = pl.BlockSpec((tn, D), lambda i, j: (j, 0))
        rhs_hbm_reads = gi * gj * tn * D * itemsize      # refetched every step
        rhs_vmem = 2 * tn * D * itemsize

    # VMEM budget: double-buffered output + LHS tiles + RHS + f32 logits scratch.
    vmem_need = (2 * tm * tn * itemsize + 2 * tm * D * itemsize
                 + rhs_vmem + tm * tn * 4)
    vmem_limit = max(vmem_need + (4 << 20), 32 << 20)    # v5e default scoped = 16 MiB

    cost = pl.CostEstimate(
        flops=2 * (gi * tm) * (gj * tn) * D,
        transcendentals=(gi * tm) * (gj * tn),
        bytes_accessed=(N * N * itemsize                 # output writes (valid region)
                        + gi * tm * D * itemsize         # LHS fetched once per i
                        + rhs_hbm_reads),
    )

    kernel = _make_kernel(tn, rhs_resident)

    # TODO(synk): on v7x, confirm via xprof that both TensorCores are engaged;
    # if one is idle, switch the i axis to pltpu.CORE_PARALLEL.
    return pl.pallas_call(
        kernel,
        out_shape=jax.ShapeDtypeStruct((N, N), z.dtype),
        grid_spec=pltpu.PrefetchScalarGridSpec(
            num_scalar_prefetch=0,
            grid=(gi, gj),
            in_specs=[
                pl.BlockSpec((tm, D), lambda i, j: (i, 0)),   # LHS rows-block i
                rhs_spec,                                      # RHS (resident or tiled)
            ],
            out_specs=pl.BlockSpec((tm, tn), lambda i, j: (i, j)),
        ),
        compiler_params=pltpu.CompilerParams(
            dimension_semantics=("parallel", "parallel"),
            vmem_limit_bytes=int(vmem_limit),
        ),
        cost_estimate=cost,
    )(z_pad, z_pad)


if __name__ == "__main__":
    key = jax.random.PRNGKey(0)
    k0, k1 = jax.random.split(key)

    # Small deterministic example: N=256 nodes, D=64 latent dims.
    N, D = 256, 64
    z = jax.random.normal(k0, (N, D), dtype=jnp.float32)
    adj_pred = jax.block_until_ready(vgae_decoder(z))
    ref = jax.nn.sigmoid(z @ z.T)
    assert adj_pred.shape == (N, N)
    assert jnp.allclose(adj_pred, ref, atol=1e-5, rtol=1e-5)

    # Ragged / multi-tile sanity check (N not a multiple of the tile): exercises
    # masked edge output writes and the in-kernel resident-RHS slicing.
    N2 = 300
    z2 = jax.random.normal(k1, (N2, D), dtype=jnp.float32)
    out2 = jax.block_until_ready(vgae_decoder(z2, tile=256))
    ref2 = jax.nn.sigmoid(z2 @ z2.T)
    assert out2.shape == (N2, N2)
    assert jnp.allclose(out2, ref2, atol=1e-5, rtol=1e-5)

    print("KERNEL_OK")
</pallas_src>

<mosaic_0001>
module attributes {stable_mosaic.version = 11 : i64} {
  func.func @kernel(%arg0: i32, %arg1: i32, %arg2: memref<256x64xf32, #tpu.memory_space<vmem>>, %arg3: memref<256x64xf32, #tpu.memory_space<vmem>>, %arg4: memref<256x256xf32, #tpu.memory_space<vmem>>) attributes {dimension_semantics = [#tpu.dimension_semantics<parallel>, #tpu.dimension_semantics<parallel>], iteration_bounds = array<i64: 1, 1>, scalar_prefetch = 0 : i64, scratch_operands = 0 : i64, tpu.core_type = #tpu.core_type<tc>, window_params = [{transform_indices = @transform_0, window_bounds = array<i64: 256, 64>}, {pipeline_mode = #tpu.pipeline_mode<synchronous>, transform_indices = @transform_1, window_bounds = array<i64: 256, 64>}, {transform_indices = @transform_2, window_bounds = array<i64: 256, 256>}]} {
    %c0 = arith.constant 0 : index
    %c0_0 = arith.constant 0 : index
    %0 = vector.load %arg2[%c0, %c0_0] : memref<256x64xf32, #tpu.memory_space<vmem>>, vector<256x64xf32>
    %cst = arith.constant 5.000000e-01 : f32
    %1 = vector.broadcast %cst : f32 to vector<256x64xf32>
    %2 = arith.mulf %0, %1 : vector<256x64xf32>
    %c256_i32 = arith.constant 256 : i32
    %3 = arith.muli %arg1, %c256_i32 : i32
    %4 = tpu.assume_multiple %3, 128 : i32
    %5 = arith.index_cast %4 : i32 to index
    %c0_1 = arith.constant 0 : index
    %6 = vector.load %arg3[%5, %c0_1] : memref<256x64xf32, #tpu.memory_space<vmem>>, vector<256x64xf32>
    %cst_2 = arith.constant dense<0.000000e+00> : vector<256x256xf32>
    %7 = tpu.matmul %2, %6, %cst_2 {dimension_numbers = #tpu.dot_dimension_numbers<[1], [1], [0], [0], [0, 0, 1, 0], [], []>} : vector<256x64xf32>, vector<256x64xf32>, vector<256x256xf32> -> vector<256x256xf32>
    %8 = math.tanh %7 : vector<256x256xf32>
    %cst_3 = arith.constant 5.000000e-01 : f32
    %9 = vector.broadcast %cst_3 : f32 to vector<256x256xf32>
    %10 = arith.mulf %9, %8 : vector<256x256xf32>
    %cst_4 = arith.constant 5.000000e-01 : f32
    %11 = vector.broadcast %cst_4 : f32 to vector<256x256xf32>
    %12 = arith.addf %10, %11 : vector<256x256xf32>
    %c0_5 = arith.constant 0 : index
    %c0_6 = arith.constant 0 : index
    %13 = vector.load %arg4[%c0_5, %c0_6] : memref<256x256xf32, #tpu.memory_space<vmem>>, vector<256x256xf32>
    tpu.vector_store %arg4[%c0_5, %c0_6], %12 {strides = array<i32>} : memref<256x256xf32, #tpu.memory_space<vmem>>, vector<256x256xf32>,
    return
  }
  func.func @transform_0(%arg0: i32, %arg1: i32) -> (i32, i32) {
    %c0_i32 = arith.constant 0 : i32
    %c0_i32_0 = arith.constant 0 : i32
    return %arg0, %c0_i32 : i32, i32
  }
  func.func @transform_1(%arg0: i32, %arg1: i32) -> (i32, i32) {
    %c0_i32 = arith.constant 0 : i32
    %c0_i32_0 = arith.constant 0 : i32
    %c0_i32_1 = arith.constant 0 : i32
    return %c0_i32, %c0_i32_0 : i32, i32
  }
  func.func @transform_2(%arg0: i32, %arg1: i32) -> (i32, i32) {
    %c0_i32 = arith.constant 0 : i32
    return %arg0, %arg1 : i32, i32
  }
}

</mosaic_0001>

<llo_original>
// kernel: tpu_custom_call.1
$region0: #{tpu_custom_call.1}
  #allocation0 [shape = 'u32[]', space=smem, size = 0x4, offset = 0x4, fixed_abs, tag = 'smem constant byte address 0x4 - core index']
  #allocation1 [shape = 'u32[144,128]{1,0:T(1,128)}', space=vmem, size = 0x12000, scoped, tag = 'internal scratch']
  %s0 = inlined_call_operand.vmem [shape: f32[256,64], index: 0, kind: input, shape index: {}]
  %s1 = inlined_call_operand.vmem [shape: f32[256,64], index: 1, kind: input, shape index: {}]
  %s2 = inlined_call_operand.hbm [shape: f32[256,256], index: 2, kind: output, shape index: {}]
  %s3 = sld [smem:[#allocation0]]
  $region18: #{tpu_custom_call.1} parent=0
    _
  %s5 = ssub.s32 1, %s3
  %s6 = scalar_select 0, %s5, %s3
  $region1: #{tpu_custom_call.1} parent=0
    #allocation2 [shape = 'u8[262144]{0}', space=vmem, size = 0x40000, scoped, tag = 'output window, operand 0, single buffered']
    #allocation3 [shape = 's32[1]{0}', space=sflag, size = 0x4, scoped, tag = 'scoped memory for tpu_custom_call.1']
    %7 = vsyncpa [#allocation3], 0
    // Predicated region
    $region2: #{tpu_custom_call.1} parent=1 // pred_check
      _
    $region3: #{tpu_custom_call.1} parent=1 // pred_check_branch
      %9 = sbr.rel (0) target = $region5
    $region4: #{tpu_custom_call.1} parent=1 // pred_region
      _
    $region5: #{tpu_custom_call.1} parent=1 // pred_fallthru
      _
    // Predicated region
    $region6: #{tpu_custom_call.1} parent=1 // pred_check
      _
    $region7: #{tpu_custom_call.1} parent=1 // pred_check_branch
      %11 = sbr.rel (0) target = $region9
    $region8: #{tpu_custom_call.1} parent=1 // pred_region
      _
    $region9: #{tpu_custom_call.1} parent=1 // pred_fallthru
      _
    %v12 = vld [vmem:[%s0] sm:$0xff]
    %v13 = vld [vmem:[%s0 + $0x8] sm:$0xff]
    %v14 = vld [vmem:[%s0 + $0x10] sm:$0xff]
    %v15 = vld [vmem:[%s0 + $0x18] sm:$0xff]
    %v16 = vld [vmem:[%s0 + $0x20] sm:$0xff]
    %v17 = vld [vmem:[%s0 + $0x28] sm:$0xff]
    %v18 = vld [vmem:[%s0 + $0x30] sm:$0xff]
    %v19 = vld [vmem:[%s0 + $0x38] sm:$0xff]
    %v20 = vld [vmem:[%s0 + $0x40] sm:$0xff]
    %v21 = vld [vmem:[%s0 + $0x48] sm:$0xff]
    %v22 = vld [vmem:[%s0 + $0x50] sm:$0xff]
    %v23 = vld [vmem:[%s0 + $0x58] sm:$0xff]
    %v24 = vld [vmem:[%s0 + $0x60] sm:$0xff]
    %v25 = vld [vmem:[%s0 + $0x68] sm:$0xff]
    %v26 = vld [vmem:[%s0 + $0x70] sm:$0xff]
    %v27 = vld [vmem:[%s0 + $0x78] sm:$0xff]
    %v28 = vld [vmem:[%s0 + $0x80] sm:$0xff]
    %v29 = vld [vmem:[%s0 + $0x88] sm:$0xff]
    %v30 = vld [vmem:[%s0 + $0x90] sm:$0xff]
    %v31 = vld [vmem:[%s0 + $0x98] sm:$0xff]
    %v32 = vld [vmem:[%s0 + $0xa0] sm:$0xff]
    %v33 = vld [vmem:[%s0 + $0xa8] sm:$0xff]
    %v34 = vld [vmem:[%s0 + $0xb0] sm:$0xff]
    %v35 = vld [vmem:[%s0 + $0xb8] sm:$0xff]
    %v36 = vld [vmem:[%s0 + $0xc0] sm:$0xff]
    %v37 = vld [vmem:[%s0 + $0xc8] sm:$0xff]
    %v38 = vld [vmem:[%s0 + $0xd0] sm:$0xff]
    %v39 = vld [vmem:[%s0 + $0xd8] sm:$0xff]
    %v40 = vld [vmem:[%s0 + $0xe0] sm:$0xff]
    %v41 = vld [vmem:[%s0 + $0xe8] sm:$0xff]
    %v42 = vld [vmem:[%s0 + $0xf0] sm:$0xff]
    %v43 = vld [vmem:[%s0 + $0xf8] sm:$0xff]
    %v44 = vmul.f32 %v12, 0.5
    %v45 = vmul.f32 %v13, 0.5
    %v46 = vmul.f32 %v14, 0.5
    %v47 = vmul.f32 %v15, 0.5
    %v48 = vmul.f32 %v16, 0.5
    %v49 = vmul.f32 %v17, 0.5
    %v50 = vmul.f32 %v18, 0.5
    %v51 = vmul.f32 %v19, 0.5
    %v52 = vmul.f32 %v20, 0.5
    %v53 = vmul.f32 %v21, 0.5
    %v54 = vmul.f32 %v22, 0.5
    %v55 = vmul.f32 %v23, 0.5
    %v56 = vmul.f32 %v24, 0.5
    %v57 = vmul.f32 %v25, 0.5
    %v58 = vmul.f32 %v26, 0.5
    %v59 = vmul.f32 %v27, 0.5
    %v60 = vmul.f32 %v28, 0.5
    %v61 = vmul.f32 %v29, 0.5
    %v62 = vmul.f32 %v30, 0.5
    %v63 = vmul.f32 %v31, 0.5
    %v64 = vmul.f32 %v32, 0.5
    %v65 = vmul.f32 %v33, 0.5
    %v66 = vmul.f32 %v34, 0.5
    %v67 = vmul.f32 %v35, 0.5
    %v68 = vmul.f32 %v36, 0.5
    %v69 = vmul.f32 %v37, 0.5
    %v70 = vmul.f32 %v38, 0.5
    %v71 = vmul.f32 %v39, 0.5
    %v72 = vmul.f32 %v40, 0.5
    %v73 = vmul.f32 %v41, 0.5
    %v74 = vmul.f32 %v42, 0.5
    %v75 = vmul.f32 %v43, 0.5
    %s76 = smul.u32 0, 256
    %s77 = scalar_lea.vmem %s1, %s76
    %v78 = vld [vmem:[%s77] sm:$0xff]
    %v79 = vld [vmem:[%s77 + $0x8] sm:$0xff]
    %v80 = vld [vmem:[%s77 + $0x10] sm:$0xff]
    %v81 = vld [vmem:[%s77 + $0x18] sm:$0xff]
    %v82 = vld [vmem:[%s77 + $0x20] sm:$0xff]
    %v83 = vld [vmem:[%s77 + $0x28] sm:$0xff]
    %v84 = vld [vmem:[%s77 + $0x30] sm:$0xff]
    %v85 = vld [vmem:[%s77 + $0x38] sm:$0xff]
    %v86 = vld [vmem:[%s77 + $0x40] sm:$0xff]
    %v87 = vld [vmem:[%s77 + $0x48] sm:$0xff]
    %v88 = vld [vmem:[%s77 + $0x50] sm:$0xff]
    %v89 = vld [vmem:[%s77 + $0x58] sm:$0xff]
    %v90 = vld [vmem:[%s77 + $0x60] sm:$0xff]
    %v91 = vld [vmem:[%s77 + $0x68] sm:$0xff]
    %v92 = vld [vmem:[%s77 + $0x70] sm:$0xff]
    %v93 = vld [vmem:[%s77 + $0x78] sm:$0xff]
    %v94 = vld [vmem:[%s77 + $0x80] sm:$0xff]
    %v95 = vld [vmem:[%s77 + $0x88] sm:$0xff]
    %v96 = vld [vmem:[%s77 + $0x90] sm:$0xff]
    %v97 = vld [vmem:[%s77 + $0x98] sm:$0xff]
    %v98 = vld [vmem:[%s77 + $0xa0] sm:$0xff]
    %v99 = vld [vmem:[%s77 + $0xa8] sm:$0xff]
    %v100 = vld [vmem:[%s77 + $0xb0] sm:$0xff]
    %v101 = vld [vmem:[%s77 + $0xb8] sm:$0xff]
    %v102 = vld [vmem:[%s77 + $0xc0] sm:$0xff]
    %v103 = vld [vmem:[%s77 + $0xc8] sm:$0xff]
    %v104 = vld [vmem:[%s77 + $0xd0] sm:$0xff]
    %v105 = vld [vmem:[%s77 + $0xd8] sm:$0xff]
    %v106 = vld [vmem:[%s77 + $0xe0] sm:$0xff]
    %v107 = vld [vmem:[%s77 + $0xe8] sm:$0xff]
    %v108 = vld [vmem:[%s77 + $0xf0] sm:$0xff]
    %v109 = vld [vmem:[%s77 + $0xf8] sm:$0xff]
    %vm110 = vcmask 523264
    %v112 = vsel %vm110, %v44, 0
    %v115 = vsel %vm110, %v45, 0
    %v118 = vsel %vm110, %v46, 0
    %v121 = vsel %vm110, %v47, 0
    %v124 = vsel %vm110, %v48, 0
    %v127 = vsel %vm110, %v49, 0
    %v130 = vsel %vm110, %v50, 0
    %v133 = vsel %vm110, %v51, 0
    %v136 = vsel %vm110, %v52, 0
    %v139 = vsel %vm110, %v53, 0
    %v142 = vsel %vm110, %v54, 0
    %v145 = vsel %vm110, %v55, 0
    %v148 = vsel %vm110, %v56, 0
    %v151 = vsel %vm110, %v57, 0
    %v154 = vsel %vm110, %v58, 0
    %v157 = vsel %vm110, %v59, 0
    %v160 = vsel %vm110, %v60, 0
    %v163 = vsel %vm110, %v61, 0
    %v166 = vsel %vm110, %v62, 0
    %v169 = vsel %vm110, %v63, 0
    %v172 = vsel %vm110, %v64, 0
    %v175 = vsel %vm110, %v65, 0
    %v178 = vsel %vm110, %v66, 0
    %v181 = vsel %vm110, %v67, 0
    %v184 = vsel %vm110, %v68, 0
    %v187 = vsel %vm110, %v69, 0
    %v190 = vsel %vm110, %v70, 0
    %v193 = vsel %vm110, %v71, 0
    %v196 = vsel %vm110, %v72, 0
    %v199 = vsel %vm110, %v73, 0
    %v202 = vsel %vm110, %v74, 0
    %v205 = vsel %vm110, %v75, 0
    %v208 = vsel %vm110, %v78, 0
    %v211 = vsel %vm110, %v79, 0
    %v214 = vsel %vm110, %v80, 0
    %v217 = vsel %vm110, %v81, 0
    %v220 = vsel %vm110, %v82, 0
    %v223 = vsel %vm110, %v83, 0
    %v226 = vsel %vm110, %v84, 0
    %v229 = vsel %vm110, %v85, 0
    %v232 = vsel %vm110, %v86, 0
    %v235 = vsel %vm110, %v87, 0
    %v238 = vsel %vm110, %v88, 0
    %v241 = vsel %vm110, %v89, 0
    %v244 = vsel %vm110, %v90, 0
    %v247 = vsel %vm110, %v91, 0
    %v250 = vsel %vm110, %v92, 0
    %v253 = vsel %vm110, %v93, 0
    %v256 = vsel %vm110, %v94, 0
    %v259 = vsel %vm110, %v95, 0
    %v262 = vsel %vm110, %v96, 0
    %v265 = vsel %vm110, %v97, 0
    %v268 = vsel %vm110, %v98, 0
    %v271 = vsel %vm110, %v99, 0
    %v274 = vsel %vm110, %v100, 0
    %v277 = vsel %vm110, %v101, 0
    %v280 = vsel %vm110, %v102, 0
    %v283 = vsel %vm110, %v103, 0
    %v286 = vsel %vm110, %v104, 0
    %v289 = vsel %vm110, %v105, 0
    %v292 = vsel %vm110, %v106, 0
    %v295 = vsel %vm110, %v107, 0
    %v298 = vsel %vm110, %v108, 0
    %v301 = vsel %vm110, %v109, 0
    %303 = vmatprep.subr.mxu0 0.0
    %304 = vmatpush1.xpose.msra.mxu0 %v253
    %305 = vmatprep.subr.mxu0 0.0
    %306 = vmatpush1.xpose.msra.mxu0 %v250
    %307 = vmatprep.subr.mxu0 0.0
    %308 = vmatpush1.xpose.msra.mxu0 %v247
    %309 = vmatprep.subr.mxu0 0.0
    %310 = vmatpush1.xpose.msra.mxu0 %v244
    %311 = vmatprep.subr.mxu0 0.0
    %312 = vmatpush1.xpose.msra.mxu0 %v241
    %313 = vmatprep.subr.mxu0 0.0
    %314 = vmatpush1.xpose.msra.mxu0 %v238
    %315 = vmatprep.subr.mxu0 0.0
    %316 = vmatpush1.xpose.msra.mxu0 %v235
    %317 = vmatprep.subr.mxu0 0.0
    %318 = vmatpush1.xpose.msra.mxu0 %v232
    %319 = vmatprep.subr.mxu0 0.0
    %320 = vmatpush1.xpose.msra.mxu0 %v229
    %321 = vmatprep.subr.mxu0 0.0
    %322 = vmatpush1.xpose.msra.mxu0 %v226
    %323 = vmatprep.subr.mxu0 0.0
    %324 = vmatpush1.xpose.msra.mxu0 %v223
    %325 = vmatprep.subr.mxu0 0.0
    %326 = vmatpush1.xpose.msra.mxu0 %v220
    %327 = vmatprep.subr.mxu0 0.0
    %328 = vmatpush1.xpose.msra.mxu0 %v217
    %329 = vmatprep.subr.mxu0 0.0
    %330 = vmatpush1.xpose.msra.mxu0 %v214
    %331 = vmatprep.subr.mxu0 0.0
    %332 = vmatpush1.xpose.msra.mxu0 %v211
    %333 = vmatprep.subr.mxu0 0.0
    %334 = vmatpush1.xpose.msra.mxu0 %v208
    %335 = vmatprep.subr.mxu0 0.0
    %336 = vmatpush2.xpose.msra.mxu0 %v301
    %337 = vmatprep.subr.mxu0 0.0
    %338 = vmatpush2.xpose.msra.mxu0 %v298
    %339 = vmatprep.subr.mxu0 0.0
    %340 = vmatpush2.xpose.msra.mxu0 %v295
    %341 = vmatprep.subr.mxu0 0.0
    %342 = vmatpush2.xpose.msra.mxu0 %v292
    %343 = vmatprep.subr.mxu0 0.0
    %344 = vmatpush2.xpose.msra.mxu0 %v289
    %345 = vmatprep.subr.mxu0 0.0
    %346 = vmatpush2.xpose.msra.mxu0 %v286
    %347 = vmatprep.subr.mxu0 0.0
    %348 = vmatpush2.xpose.msra.mxu0 %v283
    %349 = vmatprep.subr.mxu0 0.0
    %350 = vmatpush2.xpose.msra.mxu0 %v280
    %351 = vmatprep.subr.mxu0 0.0
    %352 = vmatpush2.xpose.msra.mxu0 %v277
    %353 = vmatprep.subr.mxu0 0.0
    %354 = vmatpush2.xpose.msra.mxu0 %v274
    %355 = vmatprep.subr.mxu0 0.0
    %356 = vmatpush2.xpose.msra.mxu0 %v271
    %357 = vmatprep.subr.mxu0 0.0
    %358 = vmatpush2.xpose.msra.mxu0 %v268
    %359 = vmatprep.subr.mxu0 0.0
    %360 = vmatpush2.xpose.msra.mxu0 %v265
    %361 = vmatprep.subr.mxu0 0.0
    %362 = vmatpush2.xpose.msra.mxu0 %v262
    %363 = vmatprep.subr.mxu0 0.0
    %364 = vmatpush2.xpose.msra.mxu0 %v259
    %365 = vmatprep.subr.mxu0 0.0
    %366 = vmatpush2.xpose.msra.mxu0 %v256
    %367 = vmatprep.mubr.f32.mxu0 0.0
    %368 = vmatmul.mubr.f32.gmra.mxu0 %v112
    %v369 = vpop.f32.mrf.mxu0
    %v370 = vadd.f32 0.0, %v369
    %v371 = vpop.f32.mrf.mxu0
    %v372 = vadd.f32 0.0, %v371
    %373 = vmatprep.mubr.f32.mxu0 0.0
    %374 = vmatmul.mubr.f32.gmra.mxu0 %v115
    %v375 = vpop.f32.mrf.mxu0
    %v376 = vadd.f32 0.0, %v375
    %v377 = vpop.f32.mrf.mxu0
    %v378 = vadd.f32 0.0, %v377
    %379 = vmatprep.mubr.f32.mxu0 0.0
    %380 = vmatmul.mubr.f32.gmra.mxu0 %v118
    %v381 = vpop.f32.mrf.mxu0
    %v382 = vadd.f32 0.0, %v381
    %v383 = vpop.f32.mrf.mxu0
    %v384 = vadd.f32 0.0, %v383
    %385 = vmatprep.mubr.f32.mxu0 0.0
    %386 = vmatmul.mubr.f32.gmra.mxu0 %v121
    %v387 = vpop.f32.mrf.mxu0
    %v388 = vadd.f32 0.0, %v387
    %v389 = vpop.f32.mrf.mxu0
    %v390 = vadd.f32 0.0, %v389
    %391 = vmatprep.mubr.f32.mxu0 0.0
    %392 = vmatmul.mubr.f32.gmra.mxu0 %v124
    %v393 = vpop.f32.mrf.mxu0
    %v394 = vadd.f32 0.0, %v393
    %v395 = vpop.f32.mrf.mxu0
    %v396 = vadd.f32 0.0, %v395
    %397 = vmatprep.mubr.f32.mxu0 0.0
    %398 = vmatmul.mubr.f32.gmra.mxu0 %v127
    %v399 = vpop.f32.mrf.mxu0
    %v400 = vadd.f32 0.0, %v399
    %v401 = vpop.f32.mrf.mxu0
    %v402 = vadd.f32 0.0, %v401
    %403 = vmatprep.mubr.f32.mxu0 0.0
    %404 = vmatmul.mubr.f32.gmra.mxu0 %v130
    %v405 = vpop.f32.mrf.mxu0
    %v406 = vadd.f32 0.0, %v405
    %v407 = vpop.f32.mrf.mxu0
    %v408 = vadd.f32 0.0, %v407
    %409 = vmatprep.mubr.f32.mxu0 0.0
    %410 = vmatmul.mubr.f32.gmra.mxu0 %v133
    %v411 = vpop.f32.mrf.mxu0
    %v412 = vadd.f32 0.0, %v411
    %v413 = vpop.f32.mrf.mxu0
    %v414 = vadd.f32 0.0, %v413
    %415 = vmatprep.mubr.f32.mxu0 0.0
    %416 = vmatmul.mubr.f32.gmra.mxu0 %v136
    %v417 = vpop.f32.mrf.mxu0
    %v418 = vadd.f32 0.0, %v417
    %v419 = vpop.f32.mrf.mxu0
    %v420 = vadd.f32 0.0, %v419
    %421 = vmatprep.mubr.f32.mxu0 0.0
    %422 = vmatmul.mubr.f32.gmra.mxu0 %v139
    %v423 = vpop.f32.mrf.mxu0
    %v424 = vadd.f32 0.0, %v423
    %v425 = vpop.f32.mrf.mxu0
    %v426 = vadd.f32 0.0, %v425
    %427 = vmatprep.mubr.f32.mxu0 0.0
    %428 = vmatmul.mubr.f32.gmra.mxu0 %v142
    %v429 = vpop.f32.mrf.mxu0
    %v430 = vadd.f32 0.0, %v429
    %v431 = vpop.f32.mrf.mxu0
    %v432 = vadd.f32 0.0, %v431
    %433 = vmatprep.mubr.f32.mxu0 0.0
    %434 = vmatmul.mubr.f32.gmra.mxu0 %v145
    %v435 = vpop.f32.mrf.mxu0
    %v436 = vadd.f32 0.0, %v435
    %v437 = vpop.f32.mrf.mxu0
    %v438 = vadd.f32 0.0, %v437
    %439 = vmatprep.mubr.f32.mxu0 0.0
    %440 = vmatmul.mubr.f32.gmra.mxu0 %v148
    %v441 = vpop.f32.mrf.mxu0
    %v442 = vadd.f32 0.0, %v441
    %v443 = vpop.f32.mrf.mxu0
    %v444 = vadd.f32 0.0, %v443
    %445 = vmatprep.mubr.f32.mxu0 0.0
    %446 = vmatmul.mubr.f32.gmra.mxu0 %v151
    %v447 = vpop.f32.mrf.mxu0
    %v448 = vadd.f32 0.0, %v447
    %v449 = vpop.f32.mrf.mxu0
    %v450 = vadd.f32 0.0, %v449
    %451 = vmatprep.mubr.f32.mxu0 0.0
    %452 = vmatmul.mubr.f32.gmra.mxu0 %v154
    %v453 = vpop.f32.mrf.mxu0
    %v454 = vadd.f32 0.0, %v453
    %v455 = vpop.f32.mrf.mxu0
    %v456 = vadd.f32 0.0, %v455
    %457 = vmatprep.mubr.f32.mxu0 0.0
    %458 = vmatmul.mubr.f32.gmra.mxu0 %v157
    %v459 = vpop.f32.mrf.mxu0
    %v460 = vadd.f32 0.0, %v459
    %v461 = vpop.f32.mrf.mxu0
    %v462 = vadd.f32 0.0, %v461
    %463 = vmatprep.mubr.f32.mxu0 0.0
    %464 = vmatmul.mubr.f32.gmra.mxu0 %v160
    %v465 = vpop.f32.mrf.mxu0
    %v466 = vadd.f32 0.0, %v465
    %v467 = vpop.f32.mrf.mxu0
    %v468 = vadd.f32 0.0, %v467
    %469 = vmatprep.mubr.f32.mxu0 0.0
    %470 = vmatmul.mubr.f32.gmra.mxu0 %v163
    %v471 = vpop.f32.mrf.mxu0
    %v472 = vadd.f32 0.0, %v471
    %v473 = vpop.f32.mrf.mxu0
    %v474 = vadd.f32 0.0, %v473
    %475 = vmatprep.mubr.f32.mxu0 0.0
    %476 = vmatmul.mubr.f32.gmra.mxu0 %v166
    %v477 = vpop.f32.mrf.mxu0
    %v478 = vadd.f32 0.0, %v477
    %v479 = vpop.f32.mrf.mxu0
    %v480 = vadd.f32 0.0, %v479
    %481 = vmatprep.mubr.f32.mxu0 0.0
    %482 = vmatmul.mubr.f32.gmra.mxu0 %v169
    %v483 = vpop.f32.mrf.mxu0
    %v484 = vadd.f32 0.0, %v483
    %v485 = vpop.f32.mrf.mxu0
    %v486 = vadd.f32 0.0, %v485
    %487 = vmatprep.mubr.f32.mxu0 0.0
    %488 = vmatmul.mubr.f32.gmra.mxu0 %v172
    %v489 = vpop.f32.mrf.mxu0
    %v490 = vadd.f32 0.0, %v489
    %v491 = vpop.f32.mrf.mxu0
    %v492 = vadd.f32 0.0, %v491
    %493 = vmatprep.mubr.f32.mxu0 0.0
    %494 = vmatmul.mubr.f32.gmra.mxu0 %v175
    %v495 = vpop.f32.mrf.mxu0
    %v496 = vadd.f32 0.0, %v495
    %v497 = vpop.f32.mrf.mxu0
    %v498 = vadd.f32 0.0, %v497
    %499 = vmatprep.mubr.f32.mxu0 0.0
    %500 = vmatmul.mubr.f32.gmra.mxu0 %v178
    %v501 = vpop.f32.mrf.mxu0
    %v502 = vadd.f32 0.0, %v501
    %v503 = vpop.f32.mrf.mxu0
    %v504 = vadd.f32 0.0, %v503
    %505 = vmatprep.mubr.f32.mxu0 0.0
    %506 = vmatmul.mubr.f32.gmra.mxu0 %v181
    %v507 = vpop.f32.mrf.mxu0
    %v508 = vadd.f32 0.0, %v507
    %v509 = vpop.f32.mrf.mxu0
    %v510 = vadd.f32 0.0, %v509
    %511 = vmatprep.mubr.f32.mxu0 0.0
    %512 = vmatmul.mubr.f32.gmra.mxu0 %v184
    %v513 = vpop.f32.mrf.mxu0
    %v514 = vadd.f32 0.0, %v513
    %v515 = vpop.f32.mrf.mxu0
    %v516 = vadd.f32 0.0, %v515
    %517 = vmatprep.mubr.f32.mxu0 0.0
    %518 = vmatmul.mubr.f32.gmra.mxu0 %v187
    %v519 = vpop.f32.mrf.mxu0
    %v520 = vadd.f32 0.0, %v519
    %v521 = vpop.f32.mrf.mxu0
    %v522 = vadd.f32 0.0, %v521
    %523 = vmatprep.mubr.f32.mxu0 0.0
    %524 = vmatmul.mubr.f32.gmra.mxu0 %v190
    %v525 = vpop.f32.mrf.mxu0
    %v526 = vadd.f32 0.0, %v525
    %v527 = vpop.f32.mrf.mxu0
    %v528 = vadd.f32 0.0, %v527
    %529 = vmatprep.mubr.f32.mxu0 0.0
    %530 = vmatmul.mubr.f32.gmra.mxu0 %v193
    %v531 = vpop.f32.mrf.mxu0
    %v532 = vadd.f32 0.0, %v531
    %v533 = vpop.f32.mrf.mxu0
    %v534 = vadd.f32 0.0, %v533
    %535 = vmatprep.mubr.f32.mxu0 0.0
    %536 = vmatmul.mubr.f32.gmra.mxu0 %v196
    %v537 = vpop.f32.mrf.mxu0
    %v538 = vadd.f32 0.0, %v537
    %v539 = vpop.f32.mrf.mxu0
    %v540 = vadd.f32 0.0, %v539
    %541 = vmatprep.mubr.f32.mxu0 0.0
    %542 = vmatmul.mubr.f32.gmra.mxu0 %v199
    %v543 = vpop.f32.mrf.mxu0
    %v544 = vadd.f32 0.0, %v543
    %v545 = vpop.f32.mrf.mxu0
    %v546 = vadd.f32 0.0, %v545
    %547 = vmatprep.mubr.f32.mxu0 0.0
    %548 = vmatmul.mubr.f32.gmra.mxu0 %v202
    %v549 = vpop.f32.mrf.mxu0
    %v550 = vadd.f32 0.0, %v549
    %v551 = vpop.f32.mrf.mxu0
    %v552 = vadd.f32 0.0, %v551
    %553 = vmatprep.mubr.f32.mxu0 0.0
    %554 = vmatmul.mubr.f32.gmra.mxu0 %v205
    %v555 = vpop.f32.mrf.mxu0
    %v556 = vadd.f32 0.0, %v555
    %v557 = vpop.f32.mrf.mxu0
    %v558 = vadd.f32 0.0, %v557
    %559 = vdwg.mxu0
    %v560 = vtanh.pop %v370
    %v561 = vtanh.pop %v372
    %v562 = vtanh.pop %v376
    %v563 = vtanh.pop %v378
    %v564 = vtanh.pop %v382
    %v565 = vtanh.pop %v384
    %v566 = vtanh.pop %v388
    %v567 = vtanh.pop %v390
    %v568 = vtanh.pop %v394
    %v569 = vtanh.pop %v396
    %v570 = vtanh.pop %v400
    %v571 = vtanh.pop %v402
    %v572 = vtanh.pop %v406
    %v573 = vtanh.pop %v408
    %v574 = vtanh.pop %v412
    %v575 = vtanh.pop %v414
    %v576 = vtanh.pop %v418
    %v577 = vtanh.pop %v420
    %v578 = vtanh.pop %v424
    %v579 = vtanh.pop %v426
    %v580 = vtanh.pop %v430
    %v581 = vtanh.pop %v432
    %v582 = vtanh.pop %v436
    %v583 = vtanh.pop %v438
    %v584 = vtanh.pop %v442
    %v585 = vtanh.pop %v444
    %v586 = vtanh.pop %v448
    %v587 = vtanh.pop %v450
    %v588 = vtanh.pop %v454
    %v589 = vtanh.pop %v456
    %v590 = vtanh.pop %v460
    %v591 = vtanh.pop %v462
    %v592 = vtanh.pop %v466
    %v593 = vtanh.pop %v468
    %v594 = vtanh.pop %v472
    %v595 = vtanh.pop %v474
    %v596 = vtanh.pop %v478
    %v597 = vtanh.pop %v480
    %v598 = vtanh.pop %v484
    %v599 = vtanh.pop %v486
    %v600 = vtanh.pop %v490
    %v601 = vtanh.pop %v492
    %v602 = vtanh.pop %v496
    %v603 = vtanh.pop %v498
    %v604 = vtanh.pop %v502
    %v605 = vtanh.pop %v504
    %v606 = vtanh.pop %v508
    %v607 = vtanh.pop %v510
    %v608 = vtanh.pop %v514
    %v609 = vtanh.pop %v516
    %v610 = vtanh.pop %v520
    %v611 = vtanh.pop %v522
    %v612 = vtanh.pop %v526
    %v613 = vtanh.pop %v528
    %v614 = vtanh.pop %v532
    %v615 = vtanh.pop %v534
    %v616 = vtanh.pop %v538
    %v617 = vtanh.pop %v540
    %v618 = vtanh.pop %v544
    %v619 = vtanh.pop %v546
    %v620 = vtanh.pop %v550
    %v621 = vtanh.pop %v552
    %v622 = vtanh.pop %v556
    %v623 = vtanh.pop %v558
    %v624 = vmul.f32 %v560, 0.5
    %v625 = vmul.f32 %v561, 0.5
    %v626 = vmul.f32 %v562, 0.5
    %v627 = vmul.f32 %v563, 0.5
    %v628 = vmul.f32 %v564, 0.5
    %v629 = vmul.f32 %v565, 0.5
    %v630 = vmul.f32 %v566, 0.5
    %v631 = vmul.f32 %v567, 0.5
    %v632 = vmul.f32 %v568, 0.5
    %v633 = vmul.f32 %v569, 0.5
    %v634 = vmul.f32 %v570, 0.5
    %v635 = vmul.f32 %v571, 0.5
    %v636 = vmul.f32 %v572, 0.5
    %v637 = vmul.f32 %v573, 0.5
    %v638 = vmul.f32 %v574, 0.5
    %v639 = vmul.f32 %v575, 0.5
    %v640 = vmul.f32 %v576, 0.5
    %v641 = vmul.f32 %v577, 0.5
    %v642 = vmul.f32 %v578, 0.5
    %v643 = vmul.f32 %v579, 0.5
    %v644 = vmul.f32 %v580, 0.5
    %v645 = vmul.f32 %v581, 0.5
    %v646 = vmul.f32 %v582, 0.5
    %v647 = vmul.f32 %v583, 0.5
    %v648 = vmul.f32 %v584, 0.5
    %v649 = vmul.f32 %v585, 0.5
    %v650 = vmul.f32 %v586, 0.5
    %v651 = vmul.f32 %v587, 0.5
    %v652 = vmul.f32 %v588, 0.5
    %v653 = vmul.f32 %v589, 0.5
    %v654 = vmul.f32 %v590, 0.5
    %v655 = vmul.f32 %v591, 0.5
    %v656 = vmul.f32 %v592, 0.5
    %v657 = vmul.f32 %v593, 0.5
    %v658 = vmul.f32 %v594, 0.5
    %v659 = vmul.f32 %v595, 0.5
    %v660 = vmul.f32 %v596, 0.5
    %v661 = vmul.f32 %v597, 0.5
    %v662 = vmul.f32 %v598, 0.5
    %v663 = vmul.f32 %v599, 0.5
    %v664 = vmul.f32 %v600, 0.5
    %v665 = vmul.f32 %v601, 0.5
    %v666 = vmul.f32 %v602, 0.5
    %v667 = vmul.f32 %v603, 0.5
    %v668 = vmul.f32 %v604, 0.5
    %v669 = vmul.f32 %v605, 0.5
    %v670 = vmul.f32 %v606, 0.5
    %v671 = vmul.f32 %v607, 0.5
    %v672 = vmul.f32 %v608, 0.5
    %v673 = vmul.f32 %v609, 0.5
    %v674 = vmul.f32 %v610, 0.5
    %v675 = vmul.f32 %v611, 0.5
    %v676 = vmul.f32 %v612, 0.5
    %v677 = vmul.f32 %v613, 0.5
    %v678 = vmul.f32 %v614, 0.5
    %v679 = vmul.f32 %v615, 0.5
    %v680 = vmul.f32 %v616, 0.5
    %v681 = vmul.f32 %v617, 0.5
    %v682 = vmul.f32 %v618, 0.5
    %v683 = vmul.f32 %v619, 0.5
    %v684 = vmul.f32 %v620, 0.5
    %v685 = vmul.f32 %v621, 0.5
    %v686 = vmul.f32 %v622, 0.5
    %v687 = vmul.f32 %v623, 0.5
    %v688 = vadd.f32 %v624, 0.5
    %v689 = vadd.f32 %v625, 0.5
    %v690 = vadd.f32 %v626, 0.5
    %v691 = vadd.f32 %v627, 0.5
    %v692 = vadd.f32 %v628, 0.5
    %v693 = vadd.f32 %v629, 0.5
    %v694 = vadd.f32 %v630, 0.5
    %v695 = vadd.f32 %v631, 0.5
    %v696 = vadd.f32 %v632, 0.5
    %v697 = vadd.f32 %v633, 0.5
    %v698 = vadd.f32 %v634, 0.5
    %v699 = vadd.f32 %v635, 0.5
    %v700 = vadd.f32 %v636, 0.5
    %v701 = vadd.f32 %v637, 0.5
    %v702 = vadd.f32 %v638, 0.5
    %v703 = vadd.f32 %v639, 0.5
    %v704 = vadd.f32 %v640, 0.5
    %v705 = vadd.f32 %v641, 0.5
    %v706 = vadd.f32 %v642, 0.5
    %v707 = vadd.f32 %v643, 0.5
    %v708 = vadd.f32 %v644, 0.5
    %v709 = vadd.f32 %v645, 0.5
    %v710 = vadd.f32 %v646, 0.5
    %v711 = vadd.f32 %v647, 0.5
    %v712 = vadd.f32 %v648, 0.5
    %v713 = vadd.f32 %v649, 0.5
    %v714 = vadd.f32 %v650, 0.5
    %v715 = vadd.f32 %v651, 0.5
    %v716 = vadd.f32 %v652, 0.5
    %v717 = vadd.f32 %v653, 0.5
    %v718 = vadd.f32 %v654, 0.5
    %v719 = vadd.f32 %v655, 0.5
    %v720 = vadd.f32 %v656, 0.5
    %v721 = vadd.f32 %v657, 0.5
    %v722 = vadd.f32 %v658, 0.5
    %v723 = vadd.f32 %v659, 0.5
    %v724 = vadd.f32 %v660, 0.5
    %v725 = vadd.f32 %v661, 0.5
    %v726 = vadd.f32 %v662, 0.5
    %v727 = vadd.f32 %v663, 0.5
    %v728 = vadd.f32 %v664, 0.5
    %v729 = vadd.f32 %v665, 0.5
    %v730 = vadd.f32 %v666, 0.5
    %v731 = vadd.f32 %v667, 0.5
    %v732 = vadd.f32 %v668, 0.5
    %v733 = vadd.f32 %v669, 0.5
    %v734 = vadd.f32 %v670, 0.5
    %v735 = vadd.f32 %v671, 0.5
    %v736 = vadd.f32 %v672, 0.5
    %v737 = vadd.f32 %v673, 0.5
    %v738 = vadd.f32 %v674, 0.5
    %v739 = vadd.f32 %v675, 0.5
    %v740 = vadd.f32 %v676, 0.5
    %v741 = vadd.f32 %v677, 0.5
    %v742 = vadd.f32 %v678, 0.5
    %v743 = vadd.f32 %v679, 0.5
    %v744 = vadd.f32 %v680, 0.5
    %v745 = vadd.f32 %v681, 0.5
    %v746 = vadd.f32 %v682, 0.5
    %v747 = vadd.f32 %v683, 0.5
    %v748 = vadd.f32 %v684, 0.5
    %v749 = vadd.f32 %v685, 0.5
    %v750 = vadd.f32 %v686, 0.5
    %v751 = vadd.f32 %v687, 0.5
    %752 = vst [vmem:[#allocation2] sm:$0xff] %v688
    %753 = vst [vmem:[#allocation2 + $0x8] sm:$0xff] %v689
    %754 = vst [vmem:[#allocation2 + $0x10] sm:$0xff] %v690
    %755 = vst [vmem:[#allocation2 + $0x18] sm:$0xff] %v691
    %756 = vst [vmem:[#allocation2 + $0x20] sm:$0xff] %v692
    %757 = vst [vmem:[#allocation2 + $0x28] sm:$0xff] %v693
    %758 = vst [vmem:[#allocation2 + $0x30] sm:$0xff] %v694
    %759 = vst [vmem:[#allocation2 + $0x38] sm:$0xff] %v695
    %760 = vst [vmem:[#allocation2 + $0x40] sm:$0xff] %v696
    %761 = vst [vmem:[#allocation2 + $0x48] sm:$0xff] %v697
    %762 = vst [vmem:[#allocation2 + $0x50] sm:$0xff] %v698
    %763 = vst [vmem:[#allocation2 + $0x58] sm:$0xff] %v699
    %764 = vst [vmem:[#allocation2 + $0x60] sm:$0xff] %v700
    %765 = vst [vmem:[#allocation2 + $0x68] sm:$0xff] %v701
    %766 = vst [vmem:[#allocation2 + $0x70] sm:$0xff] %v702
    %767 = vst [vmem:[#allocation2 + $0x78] sm:$0xff] %v703
    %768 = vst [vmem:[#allocation2 + $0x80] sm:$0xff] %v704
    %769 = vst [vmem:[#allocation2 + $0x88] sm:$0xff] %v705
    %770 = vst [vmem:[#allocation2 + $0x90] sm:$0xff] %v706
    %771 = vst [vmem:[#allocation2 + $0x98] sm:$0xff] %v707
    %772 = vst [vmem:[#allocation2 + $0xa0] sm:$0xff] %v708
    %773 = vst [vmem:[#allocation2 + $0xa8] sm:$0xff] %v709
    %774 = vst [vmem:[#allocation2 + $0xb0] sm:$0xff] %v710
    %775 = vst [vmem:[#allocation2 + $0xb8] sm:$0xff] %v711
    %776 = vst [vmem:[#allocation2 + $0xc0] sm:$0xff] %v712
    %777 = vst [vmem:[#allocation2 + $0xc8] sm:$0xff] %v713
    %778 = vst [vmem:[#allocation2 + $0xd0] sm:$0xff] %v714
    %779 = vst [vmem:[#allocation2 + $0xd8] sm:$0xff] %v715
    %780 = vst [vmem:[#allocation2 + $0xe0] sm:$0xff] %v716
    %781 = vst [vmem:[#allocation2 + $0xe8] sm:$0xff] %v717
    %782 = vst [vmem:[#allocation2 + $0xf0] sm:$0xff] %v718
    %783 = vst [vmem:[#allocation2 + $0xf8] sm:$0xff] %v719
    %784 = vst [vmem:[#allocation2 + $0x100] sm:$0xff] %v720
    %785 = vst [vmem:[#allocation2 + $0x108] sm:$0xff] %v721
    %786 = vst [vmem:[#allocation2 + $0x110] sm:$0xff] %v722
    %787 = vst [vmem:[#allocation2 + $0x118] sm:$0xff] %v723
    %788 = vst [vmem:[#allocation2 + $0x120] sm:$0xff] %v724
    %789 = vst [vmem:[#allocation2 + $0x128] sm:$0xff] %v725
    %790 = vst [vmem:[#allocation2 + $0x130] sm:$0xff] %v726
    %791 = vst [vmem:[#allocation2 + $0x138] sm:$0xff] %v727
    %792 = vst [vmem:[#allocation2 + $0x140] sm:$0xff] %v728
    %793 = vst [vmem:[#allocation2 + $0x148] sm:$0xff] %v729
    %794 = vst [vmem:[#allocation2 + $0x150] sm:$0xff] %v730
    %795 = vst [vmem:[#allocation2 + $0x158] sm:$0xff] %v731
    %796 = vst [vmem:[#allocation2 + $0x160] sm:$0xff] %v732
    %797 = vst [vmem:[#allocation2 + $0x168] sm:$0xff] %v733
    %798 = vst [vmem:[#allocation2 + $0x170] sm:$0xff] %v734
    %799 = vst [vmem:[#allocation2 + $0x178] sm:$0xff] %v735
    %800 = vst [vmem:[#allocation2 + $0x180] sm:$0xff] %v736
    %801 = vst [vmem:[#allocation2 + $0x188] sm:$0xff] %v737
    %802 = vst [vmem:[#allocation2 + $0x190] sm:$0xff] %v738
    %803 = vst [vmem:[#allocation2 + $0x198] sm:$0xff] %v739
    %804 = vst [vmem:[#allocation2 + $0x1a0] sm:$0xff] %v740
    %805 = vst [vmem:[#allocation2 + $0x1a8] sm:$0xff] %v741
    %806 = vst [vmem:[#allocation2 + $0x1b0] sm:$0xff] %v742
    %807 = vst [vmem:[#allocation2 + $0x1b8] sm:$0xff] %v743
    %808 = vst [vmem:[#allocation2 + $0x1c0] sm:$0xff] %v744
    %809 = vst [vmem:[#allocation2 + $0x1c8] sm:$0xff] %v745
    %810 = vst [vmem:[#allocation2 + $0x1d0] sm:$0xff] %v746
    %811 = vst [vmem:[#allocation2 + $0x1d8] sm:$0xff] %v747
    %812 = vst [vmem:[#allocation2 + $0x1e0] sm:$0xff] %v748
    %813 = vst [vmem:[#allocation2 + $0x1e8] sm:$0xff] %v749
    %814 = vst [vmem:[#allocation2 + $0x1f0] sm:$0xff] %v750
    %815 = vst [vmem:[#allocation2 + $0x1f8] sm:$0xff] %v751
    // Predicated region
    $region10: #{tpu_custom_call.1} parent=1 // pred_check
      _
    $region11: #{tpu_custom_call.1} parent=1 // pred_check_branch
      %817 = sbr.rel (0) target = $region13
    $region12: #{tpu_custom_call.1} parent=1 // pred_region
      %s819 = ssub.s32 8192, 8192
      %820 = vsyncadd [#allocation3], %s819
      %s821 = sshll.u32 [#allocation2], 4
      %s822 = int_to_ptr.vmem [resolvable:$true] %s821
      %827 = dma.vmem_to_hbm [thread:$0]  %s822, 8192, %s2, [#allocation3], 256, 256, 16
    $region13: #{tpu_custom_call.1} parent=1 // pred_fallthru
      _
    // Predicated region
    $region14: #{tpu_custom_call.1} parent=1 // pred_check
      _
    $region15: #{tpu_custom_call.1} parent=1 // pred_check_branch
      %829 = sbr.rel (0) target = $region17
    $region16: #{tpu_custom_call.1} parent=1 // pred_region
      %830 = dma.done [#allocation3], 8192
    $region17: #{tpu_custom_call.1} parent=1 // pred_fallthru
      _
    %831 = vsyncpa [#allocation3], 1

</llo_original>
